<compile_context>
chip_gen: v7x
topology: tpu7x:2x2x1
jax: 0.10.0
libtpu: 0.0.40
codegen_flags: <defaults>
</compile_context>

<pallas_src>
import jax
import jax.numpy as jnp
from jax.experimental import pallas as pl
from jax.experimental.pallas import tpu as pltpu


def _round_up(a, m):
    return (a + m - 1) // m * m


# ---------------------------------------------------------------------------
# Kernels
# ---------------------------------------------------------------------------

def _gen_layer_kernel(x_ref, noise_ref, w_ref, wn_ref, b_ref, o_ref):
    """Full-K path: two MXU dots accumulated in f32, fused bias + LeakyReLU."""
    y = jnp.dot(x_ref[...], w_ref[...], preferred_element_type=jnp.float32)
    y = y + jnp.dot(noise_ref[...], wn_ref[...],
                    preferred_element_type=jnp.float32)
    y = y + b_ref[...].astype(jnp.float32)
    # LeakyReLU (negative_slope = 0.01): mul+max instead of compare+select.
    o_ref[...] = jnp.maximum(y, 0.01 * y).astype(o_ref.dtype)


def _gen_layer_kernel_ktiled(x_ref, noise_ref, w_ref, wn_ref, b_ref, o_ref,
                             acc_ref):
    """K-tiled path: accumulate x@W over the k grid axis; the noise dot, bias
    and activation are applied once on the last k step (noise / Wn / bias
    block indices are k-invariant, so they stay resident across the k loop)."""
    k = pl.program_id(2)

    @pl.when(k == 0)
    def _():
        acc_ref[...] = jnp.zeros_like(acc_ref)

    acc_ref[...] += jnp.dot(x_ref[...], w_ref[...],
                            preferred_element_type=jnp.float32)

    @pl.when(k == pl.num_programs(2) - 1)
    def _():
        y = acc_ref[...] + jnp.dot(noise_ref[...], wn_ref[...],
                                   preferred_element_type=jnp.float32)
        y = y + b_ref[...].astype(jnp.float32)
        o_ref[...] = jnp.maximum(y, 0.01 * y).astype(o_ref.dtype)


# ---------------------------------------------------------------------------
# Wrapper
# ---------------------------------------------------------------------------

def generator_layer(x, noise, w, wn, b, *, matmul_dtype=None,
                    tm=None, tn=None, tk=None):
    """x: [..., in_features], noise: [..., noise_features].
    w:  [in_features,   out_features]  (PyTorch linear.weight.T)
    wn: [noise_features, out_features] (PyTorch linear_noise.weight.T)
    b:  [out_features].
    matmul_dtype: optional MXU input dtype (e.g. jnp.bfloat16 on v6e/v7x for
    the bf16-native MXU); accumulation is always f32.
    tm/tn/tk: optional tile overrides (mostly for testing)."""
    in_features = x.shape[-1]
    noise_features = noise.shape[-1]
    out_features = w.shape[-1]
    assert w.shape == (in_features, out_features)
    assert wn.shape == (noise_features, out_features)
    assert b.shape == (out_features,)
    lead_shape = x.shape[:-1]
    assert noise.shape[:-1] == lead_shape

    out_dtype = x.dtype
    if matmul_dtype is None:
        cd = jnp.promote_types(x.dtype, w.dtype)   # never silently drop precision
    else:
        cd = jnp.dtype(matmul_dtype)

    x2 = x.reshape(-1, in_features).astype(cd)
    n2 = noise.reshape(-1, noise_features).astype(cd)
    wx = w.astype(cd)
    wnx = wn.astype(cd)
    M = x2.shape[0]

    a_size = jnp.dtype(cd).itemsize
    o_size = jnp.dtype(out_dtype).itemsize
    # Minimum sublane tile: 8 for 4-byte dtypes, 16 for bf16, 32 for int8/fp8.
    min_sublane = 8 * max(1, 4 // a_size)

    # ----- lane-dense output: pad out_features to a multiple of 128 ----------
    N_pad = _round_up(out_features, 128)
    if N_pad != out_features:
        pad_n = N_pad - out_features
        wx = jnp.pad(wx, ((0, 0), (0, pad_n)))
        wnx = jnp.pad(wnx, ((0, 0), (0, pad_n)))
        b2 = jnp.pad(b.astype(jnp.float32), (0, pad_n)).reshape(1, N_pad)
    else:
        b2 = b.astype(jnp.float32).reshape(1, N_pad)

    # ----- generation-aware VMEM budget ---------------------------------------
    try:
        vmem_cap = int(pltpu.get_tpu_info().vmem_capacity_bytes)
    except Exception:
        vmem_cap = 64 * 1024 * 1024   # conservative fallback (v7x per-core size)
    budget = min(int(vmem_cap * 0.70), 96 * 1024 * 1024)

    def vmem_need(tm_, tn_, kx_, w_bufs_, wnb_bufs_, with_acc_):
        need = 2 * tm_ * kx_ * a_size                      # x tiles (double-buffered)
        need += 2 * tm_ * noise_features * a_size          # noise tiles
        need += 2 * tm_ * tn_ * o_size                     # output tiles
        need += w_bufs_ * kx_ * tn_ * a_size               # W tile(s)
        need += wnb_bufs_ * noise_features * tn_ * a_size  # Wn tile(s)
        need += wnb_bufs_ * 8 * tn_ * 4                    # bias (sublane-padded f32)
        if with_acc_:
            need += tm_ * tn_ * 4                          # f32 accumulator scratch
        return need

    m_cap = _round_up(M, min_sublane)
    tm_floor = min(256, m_cap)

    def tm_candidates():
        cands = []
        for c in (1024, 512, 256, 128, 64, 32, 16, 8):
            c = min(c, m_cap)
            c = max(min_sublane, (c // min_sublane) * min_sublane)
            if c not in cands:
                cands.append(c)
        return cands   # descending, multiples of min_sublane, <= m_cap

    user_tm, user_tn, user_tk = tm, tn, tk

    # ----- tn selection / weight residency ------------------------------------
    if user_tn is None:
        resident = (user_tk is None) and (
            vmem_need(tm_floor, N_pad, in_features, 1, 1, False) <= budget)
        if resident:
            tn = N_pad
        else:
            # N-tiling: 256-aligned tn (MXU-friendly on v6e/v7x; 2x128 on v5e),
            # sized so the double-buffered W strip stays within ~half the budget.
            tn_align = 256 if N_pad >= 256 else 128
            per_col = (in_features + noise_features) * a_size
            tn = (budget // 2) // max(1, 2 * per_col)
            tn = max(tn_align, (tn // tn_align) * tn_align)
            tn = min(tn, N_pad)
    else:
        tn = min(_round_up(int(user_tn), 128), N_pad)
        resident = (tn == N_pad) and (user_tk is None) and (
            vmem_need(tm_floor, N_pad, in_features, 1, 1, False) <= budget)

    w_bufs = 1 if resident else 2
    wnb_bufs = 1 if resident else 2

    # ----- K tiling (instead of collapsing tm) --------------------------------
    k_tiled = False
    tkx = in_features
    K_pad = in_features
    if user_tk is not None:
        k_tiled = True
        tkx = max(128, _round_up(int(user_tk), 128))
        K_pad = _round_up(in_features, tkx)
    elif (not resident and
          vmem_need(tm_floor, tn, in_features, w_bufs, wnb_bufs, False) > budget):
        k_tiled = True
        tkx = _round_up(in_features, 128)
        while tkx > 128 and vmem_need(tm_floor, tn, tkx, w_bufs, wnb_bufs, True) > budget:
            tkx = max(128, ((tkx // 2) // 128) * 128)
        K_pad = _round_up(in_features, tkx)

    if k_tiled and K_pad != in_features:
        # Zero-pad the contraction dim so ragged K tiles never feed garbage
        # into the accumulator (zeros contribute nothing).
        x2 = jnp.pad(x2, ((0, 0), (0, K_pad - in_features)))
        wx = jnp.pad(wx, ((0, K_pad - in_features), (0, 0)))

    # ----- tm selection --------------------------------------------------------
    if user_tm is not None:
        tm = max(min_sublane, (min(int(user_tm), m_cap) // min_sublane) * min_sublane)
    else:
        tm = tm_floor
        for cand in tm_candidates():
            if vmem_need(cand, tn, tkx, w_bufs, wnb_bufs, k_tiled) <= budget:
                tm = cand
                break
        while tm > min_sublane and vmem_need(tm, tn, tkx, w_bufs, wnb_bufs, k_tiled) > budget:
            tm = max(min_sublane, _round_up(tm // 2, min_sublane))

    grid_m = pl.cdiv(M, tm)
    grid_n = pl.cdiv(N_pad, tn)
    grid_k = (K_pad // tkx) if k_tiled else 1

    # ----- grid order by data reuse (only matters for single-K, tiled-N) ------
    n_outer = False
    if grid_n > 1 and grid_k == 1:
        w_total = (K_pad + noise_features) * N_pad * a_size
        act_total = M * (in_features + noise_features) * a_size
        n_outer = grid_m * w_total > grid_n * act_total

    if n_outer:
        mi = lambda a, b: b
        ni = lambda a, b: a
        grid = (grid_n, grid_m, grid_k)
    else:
        mi = lambda a, b: a
        ni = lambda a, b: b
        grid = (grid_m, grid_n, grid_k)

    # Grid-invariant weight/bias blocks need only a single VMEM buffer; only
    # bother when the saving is meaningful (>= 1 MiB).
    w_block_bytes = tkx * tn * a_size
    wn_block_bytes = noise_features * tn * a_size
    w_mode = pl.Buffered(1) if (grid_n == 1 and grid_k == 1
                                and w_block_bytes >= (1 << 20)) else None
    nb_mode = pl.Buffered(1) if (grid_n == 1 and wn_block_bytes >= (1 << 20)) else None

    def _spec(shape, index_map, mode):
        if mode is None:
            return pl.BlockSpec(shape, index_map)
        return pl.BlockSpec(shape, index_map, pipeline_mode=mode)

    x_spec = pl.BlockSpec((tm, tkx), lambda a, b, k: (mi(a, b), k))
    noise_spec = pl.BlockSpec((tm, noise_features), lambda a, b, k: (mi(a, b), 0))
    w_spec = _spec((tkx, tn), lambda a, b, k: (k, ni(a, b)), w_mode)
    wn_spec = _spec((noise_features, tn), lambda a, b, k: (0, ni(a, b)), nb_mode)
    b_spec = _spec((1, tn), lambda a, b, k: (0, ni(a, b)), nb_mode)
    o_spec = pl.BlockSpec((tm, tn), lambda a, b, k: (mi(a, b), ni(a, b)))

    if k_tiled:
        kernel = _gen_layer_kernel_ktiled
        scratch = (pltpu.VMEM((tm, tn), jnp.float32),)
    else:
        kernel = _gen_layer_kernel
        scratch = ()

    # ----- cost estimate (real fetch multiplicities) ---------------------------
    flops = 2 * M * (K_pad + noise_features) * N_pad
    if n_outer:
        x_passes, w_passes = grid_n, 1
    else:
        x_passes = 1 if grid_k == 1 else grid_n
        w_passes = 1 if (grid_n == 1 and grid_k == 1) else grid_m
    bytes_accessed = int(
        x_passes * M * K_pad * a_size
        + M * noise_features * a_size
        + w_passes * K_pad * N_pad * a_size
        + noise_features * N_pad * a_size
        + N_pad * 4
        + M * N_pad * o_size)
    cost = pl.CostEstimate(flops=int(flops), bytes_accessed=bytes_accessed,
                           transcendentals=0)

    needed = vmem_need(tm, tn, tkx, w_bufs, wnb_bufs, k_tiled)
    vmem_limit = int(min(vmem_cap, max(needed + (8 << 20), 32 << 20)))

    out = pl.pallas_call(
        kernel,
        out_shape=jax.ShapeDtypeStruct((M, N_pad), out_dtype),
        grid_spec=pltpu.PrefetchScalarGridSpec(
            num_scalar_prefetch=0,
            grid=grid,
            in_specs=[x_spec, noise_spec, w_spec, wn_spec, b_spec],
            out_specs=o_spec,
            scratch_shapes=scratch,
        ),
        compiler_params=pltpu.CompilerParams(
            dimension_semantics=("parallel", "parallel", "arbitrary"),
            vmem_limit_bytes=vmem_limit,
        ),
        cost_estimate=cost,
    )(x2, n2, wx, wnx, b2)

    if N_pad != out_features:
        out = out[:, :out_features]
    return out.reshape(*lead_shape, out_features)


def _ref_generator_layer(x, noise, w, wn, b):
    y = (jnp.dot(x, w, precision=jax.lax.Precision.HIGHEST)
         + jnp.dot(noise, wn, precision=jax.lax.Precision.HIGHEST) + b)
    return jnp.where(y > 0, y, 0.01 * y)


if __name__ == "__main__":
    # Shapes consistent with the module: [batch, seq, features]
    batch, seq = 2, 8
    in_features, out_features, noise_features = 32, 32, 16

    key = jax.random.PRNGKey(0)
    kx, kn, kw, kb, kwn = jax.random.split(key, 5)

    x = jax.random.normal(kx, (batch, seq, in_features), dtype=jnp.float32)
    noise = jax.random.normal(kn, (batch, seq, noise_features), dtype=jnp.float32)

    # PyTorch nn.Linear-style init: U(-1/sqrt(fan_in), 1/sqrt(fan_in)),
    # weights stored already transposed relative to PyTorch: [in, out].
    lim_w = 1.0 / jnp.sqrt(jnp.float32(in_features))
    lim_wn = 1.0 / jnp.sqrt(jnp.float32(noise_features))
    w = jax.random.uniform(kw, (in_features, out_features), jnp.float32, -lim_w, lim_w)
    b = jax.random.uniform(kb, (out_features,), jnp.float32, -lim_w, lim_w)
    wn = jax.random.uniform(kwn, (noise_features, out_features), jnp.float32, -lim_wn, lim_wn)

    out = jax.block_until_ready(generator_layer(x, noise, w, wn, b))
    ref = _ref_generator_layer(x, noise, w, wn, b)
    assert out.shape == (batch, seq, out_features)
    assert jnp.allclose(out, ref, atol=1e-5, rtol=1e-5), "mismatch vs reference"

    # Lane-dense shape (out_features already a multiple of 128) -> no padding path.
    in2, out2, nf2 = 128, 256, 32
    x2v = jax.random.normal(kx, (batch, seq, in2), dtype=jnp.float32)
    n2v = jax.random.normal(kn, (batch, seq, nf2), dtype=jnp.float32)
    w2 = jax.random.uniform(kw, (in2, out2), jnp.float32, -0.1, 0.1)
    b2v = jax.random.uniform(kb, (out2,), jnp.float32, -0.1, 0.1)
    wn2 = jax.random.uniform(kwn, (nf2, out2), jnp.float32, -0.1, 0.1)
    out2v = jax.block_until_ready(generator_layer(x2v, n2v, w2, wn2, b2v))
    ref2 = _ref_generator_layer(x2v, n2v, w2, wn2, b2v)
    assert jnp.allclose(out2v, ref2, atol=1e-4, rtol=1e-4), "mismatch (dense)"

    # Force the tiled-N / tiled-K accumulate path (small shapes, forced tiles).
    in3, out3, nf3 = 256, 256, 32
    x3 = jax.random.normal(kx, (4, 16, in3), dtype=jnp.float32)
    n3 = jax.random.normal(kn, (4, 16, nf3), dtype=jnp.float32)
    w3 = jax.random.uniform(kw, (in3, out3), jnp.float32, -0.05, 0.05)
    b3 = jax.random.uniform(kb, (out3,), jnp.float32, -0.05, 0.05)
    wn3 = jax.random.uniform(kwn, (nf3, out3), jnp.float32, -0.05, 0.05)
    out3v = jax.block_until_ready(
        generator_layer(x3, n3, w3, wn3, b3, tm=32, tn=128, tk=128))
    ref3 = _ref_generator_layer(x3, n3, w3, wn3, b3)
    assert jnp.allclose(out3v, ref3, atol=1e-4, rtol=1e-4), "mismatch (tiled)"

    print("KERNEL_OK")
</pallas_src>

<mosaic_0001>
module attributes {stable_mosaic.version = 11 : i64} {
  func.func @_gen_layer_kernel(%arg0: i32, %arg1: i32, %arg2: i32, %arg3: memref<16x32xf32, #tpu.memory_space<vmem>>, %arg4: memref<16x16xf32, #tpu.memory_space<vmem>>, %arg5: memref<32x128xf32, #tpu.memory_space<vmem>>, %arg6: memref<16x128xf32, #tpu.memory_space<vmem>>, %arg7: memref<1x128xf32, #tpu.memory_space<vmem>>, %arg8: memref<16x128xf32, #tpu.memory_space<vmem>>) attributes {dimension_semantics = [#tpu.dimension_semantics<parallel>, #tpu.dimension_semantics<parallel>, #tpu.dimension_semantics<arbitrary>], iteration_bounds = array<i64: 1, 1, 1>, scalar_prefetch = 0 : i64, scratch_operands = 0 : i64, tpu.core_type = #tpu.core_type<tc>, window_params = [{transform_indices = @transform_0, window_bounds = array<i64: 16, 32>}, {transform_indices = @transform_1, window_bounds = array<i64: 16, 16>}, {transform_indices = @transform_2, window_bounds = array<i64: 32, 128>}, {transform_indices = @transform_3, window_bounds = array<i64: 16, 128>}, {transform_indices = @transform_4, window_bounds = array<i64: 1, 128>}, {transform_indices = @transform_5, window_bounds = array<i64: 16, 128>}]} {
    %c0 = arith.constant 0 : index
    %c0_0 = arith.constant 0 : index
    %0 = vector.load %arg3[%c0, %c0_0] : memref<16x32xf32, #tpu.memory_space<vmem>>, vector<16x32xf32>
    %c0_1 = arith.constant 0 : index
    %c0_2 = arith.constant 0 : index
    %1 = vector.load %arg5[%c0_1, %c0_2] : memref<32x128xf32, #tpu.memory_space<vmem>>, vector<32x128xf32>
    %cst = arith.constant dense<0.000000e+00> : vector<16x128xf32>
    %2 = tpu.matmul %0, %1, %cst {dimension_numbers = #tpu.dot_dimension_numbers<[1], [0], [0], [1], [0, 0, 1, 1], [], []>} : vector<16x32xf32>, vector<32x128xf32>, vector<16x128xf32> -> vector<16x128xf32>
    %c0_3 = arith.constant 0 : index
    %c0_4 = arith.constant 0 : index
    %3 = vector.load %arg4[%c0_3, %c0_4] : memref<16x16xf32, #tpu.memory_space<vmem>>, vector<16x16xf32>
    %c0_5 = arith.constant 0 : index
    %c0_6 = arith.constant 0 : index
    %4 = vector.load %arg6[%c0_5, %c0_6] : memref<16x128xf32, #tpu.memory_space<vmem>>, vector<16x128xf32>
    %cst_7 = arith.constant dense<0.000000e+00> : vector<16x128xf32>
    %5 = tpu.matmul %3, %4, %cst_7 {dimension_numbers = #tpu.dot_dimension_numbers<[1], [0], [0], [1], [0, 0, 1, 1], [], []>} : vector<16x16xf32>, vector<16x128xf32>, vector<16x128xf32> -> vector<16x128xf32>
    %6 = arith.addf %2, %5 : vector<16x128xf32>
    %c0_8 = arith.constant 0 : index
    %c0_9 = arith.constant 0 : index
    %7 = vector.load %arg7[%c0_8, %c0_9] : memref<1x128xf32, #tpu.memory_space<vmem>>, vector<1x128xf32>
    %8 = vector.broadcast %7 : vector<1x128xf32> to vector<16x128xf32>
    %9 = arith.addf %6, %8 : vector<16x128xf32>
    %cst_10 = arith.constant 0.00999999977 : f32
    %10 = vector.broadcast %cst_10 : f32 to vector<16x128xf32>
    %11 = arith.mulf %10, %9 : vector<16x128xf32>
    %12 = arith.maximumf %9, %11 : vector<16x128xf32>
    %c0_11 = arith.constant 0 : index
    %c0_12 = arith.constant 0 : index
    %13 = vector.load %arg8[%c0_11, %c0_12] : memref<16x128xf32, #tpu.memory_space<vmem>>, vector<16x128xf32>
    tpu.vector_store %arg8[%c0_11, %c0_12], %12 {strides = array<i32>} : memref<16x128xf32, #tpu.memory_space<vmem>>, vector<16x128xf32>,
    return
  }
  func.func @transform_0(%arg0: i32, %arg1: i32, %arg2: i32) -> (i32, i32) {
    %c0_i32 = arith.constant 0 : i32
    return %arg0, %arg2 : i32, i32
  }
  func.func @transform_1(%arg0: i32, %arg1: i32, %arg2: i32) -> (i32, i32) {
    %c0_i32 = arith.constant 0 : i32
    %c0_i32_0 = arith.constant 0 : i32
    return %arg0, %c0_i32 : i32, i32
  }
  func.func @transform_2(%arg0: i32, %arg1: i32, %arg2: i32) -> (i32, i32) {
    %c0_i32 = arith.constant 0 : i32
    return %arg2, %arg1 : i32, i32
  }
  func.func @transform_3(%arg0: i32, %arg1: i32, %arg2: i32) -> (i32, i32) {
    %c0_i32 = arith.constant 0 : i32
    %c0_i32_0 = arith.constant 0 : i32
    return %c0_i32, %arg1 : i32, i32
  }
  func.func @transform_4(%arg0: i32, %arg1: i32, %arg2: i32) -> (i32, i32) {
    %c0_i32 = arith.constant 0 : i32
    %c0_i32_0 = arith.constant 0 : i32
    return %c0_i32, %arg1 : i32, i32
  }
  func.func @transform_5(%arg0: i32, %arg1: i32, %arg2: i32) -> (i32, i32) {
    %c0_i32 = arith.constant 0 : i32
    return %arg0, %arg1 : i32, i32
  }
}

</mosaic_0001>

<llo_original>
// kernel: tpu_custom_call.1
$region0: #{tpu_custom_call.1}
  #allocation0 [shape = 'u32[]', space=smem, size = 0x4, offset = 0x4, fixed_abs, tag = 'smem constant byte address 0x4 - core index']
  #allocation1 [shape = 'u32[144,128]{1,0:T(1,128)}', space=vmem, size = 0x12000, scoped, tag = 'internal scratch']
  %s0 = inlined_call_operand.hbm [shape: f32[16,32], index: 0, kind: input, shape index: {}]
  %s1 = inlined_call_operand.hbm [shape: f32[16,16], index: 1, kind: input, shape index: {}]
  %s2 = inlined_call_operand.hbm [shape: f32[32,128], index: 2, kind: input, shape index: {}]
  %s3 = inlined_call_operand.hbm [shape: f32[16,128], index: 3, kind: input, shape index: {}]
  %s4 = inlined_call_operand.vmem [shape: f32[1,128], index: 4, kind: input, shape index: {}]
  %s5 = inlined_call_operand.hbm [shape: f32[16,128], index: 5, kind: output, shape index: {}]
  %s6 = sld [smem:[#allocation0]]
  $region46: #{tpu_custom_call.1} parent=0
    _
  %s8 = ssub.s32 1, %s6
  %s9 = scalar_select 0, %s8, %s6
  $region1: #{tpu_custom_call.1} parent=0
    #allocation2 [shape = 'u8[8192]{0}', space=vmem, size = 0x2000, scoped, tag = 'input window, operand 0, single buffered']
    #allocation3 [shape = 's32[1]{0}', space=sflag, size = 0x4, scoped, tag = 'scoped memory for tpu_custom_call.1']
    #allocation4 [shape = 's32[1]{0}', space=sflag, size = 0x4, scoped, tag = 'scoped memory for tpu_custom_call.1']
    #allocation5 [shape = 'u8[8192]{0}', space=vmem, size = 0x2000, scoped, tag = 'input window, operand 1, single buffered']
    #allocation6 [shape = 's32[1]{0}', space=sflag, size = 0x4, scoped, tag = 'scoped memory for tpu_custom_call.1']
    #allocation7 [shape = 'u8[16384]{0}', space=vmem, size = 0x4000, scoped, tag = 'input window, operand 2, single buffered']
    #allocation8 [shape = 'u8[8192]{0}', space=vmem, size = 0x2000, scoped, tag = 'input window, operand 3, single buffered']
    #allocation9 [shape = 's32[1]{0}', space=sflag, size = 0x4, scoped, tag = 'scoped memory for tpu_custom_call.1']
    #allocation10 [shape = 'u8[8192]{0}', space=vmem, size = 0x2000, scoped, tag = 'output window, operand 0, single buffered']
    %10 = vsyncpa [#allocation3], 0
    %11 = vsyncpa [#allocation6], 0
    %12 = vsyncpa [#allocation9], 0
    %13 = vsyncpa [#allocation4], 0
    // Predicated region
    $region2: #{tpu_custom_call.1} parent=1 // pred_check
      _
    $region3: #{tpu_custom_call.1} parent=1 // pred_check_branch
      %15 = sbr.rel (0) target = $region5
    $region4: #{tpu_custom_call.1} parent=1 // pred_region
      %s17 = ssub.s32 256, 256
      %18 = vsyncadd [#allocation3], %s17
      %s19 = sshll.u32 [#allocation2], 4
      %s20 = int_to_ptr.vmem [resolvable:$true] %s19
      %25 = dma.hbm_to_vmem [thread:$0]  %s0, 256, %s20, [#allocation3], 128, 128, 8
    $region5: #{tpu_custom_call.1} parent=1 // pred_fallthru
      _
    // Predicated region
    $region6: #{tpu_custom_call.1} parent=1 // pred_check
      _
    $region7: #{tpu_custom_call.1} parent=1 // pred_check_branch
      %27 = sbr.rel (0) target = $region9
    $region8: #{tpu_custom_call.1} parent=1 // pred_region
      %s29 = ssub.s32 256, 256
      %30 = vsyncadd [#allocation6], %s29
      %s31 = sshll.u32 [#allocation5], 4
      %s32 = int_to_ptr.vmem [resolvable:$true] %s31
      %37 = dma.hbm_to_vmem [thread:$0]  %s1, 256, %s32, [#allocation6], 128, 128, 8
    $region9: #{tpu_custom_call.1} parent=1 // pred_fallthru
      _
    // Predicated region
    $region10: #{tpu_custom_call.1} parent=1 // pred_check
      _
    $region11: #{tpu_custom_call.1} parent=1 // pred_check_branch
      %39 = sbr.rel (0) target = $region13
    $region12: #{tpu_custom_call.1} parent=1 // pred_region
      %s41 = ssub.s32 512, 512
      %42 = vsyncadd [#allocation6], %s41
      %s43 = sshll.u32 [#allocation7], 4
      %s44 = int_to_ptr.vmem [resolvable:$true] %s43
      %49 = dma.hbm_to_vmem [thread:$0]  %s2, 512, %s44, [#allocation6], 128, 128, 8
    $region13: #{tpu_custom_call.1} parent=1 // pred_fallthru
      _
    // Predicated region
    $region14: #{tpu_custom_call.1} parent=1 // pred_check
      _
    $region15: #{tpu_custom_call.1} parent=1 // pred_check_branch
      %51 = sbr.rel (0) target = $region17
    $region16: #{tpu_custom_call.1} parent=1 // pred_region
      %s53 = ssub.s32 256, 256
      %54 = vsyncadd [#allocation9], %s53
      %s55 = sshll.u32 [#allocation8], 4
      %s56 = int_to_ptr.vmem [resolvable:$true] %s55
      %61 = dma.hbm_to_vmem [thread:$0]  %s3, 256, %s56, [#allocation9], 128, 128, 8
    $region17: #{tpu_custom_call.1} parent=1 // pred_fallthru
      _
    // Predicated region
    $region18: #{tpu_custom_call.1} parent=1 // pred_check
      _
    $region19: #{tpu_custom_call.1} parent=1 // pred_check_branch
      %63 = sbr.rel (0) target = $region21
    $region20: #{tpu_custom_call.1} parent=1 // pred_region
      _
    $region21: #{tpu_custom_call.1} parent=1 // pred_fallthru
      _
    // Predicated region
    $region22: #{tpu_custom_call.1} parent=1 // pred_check
      _
    $region23: #{tpu_custom_call.1} parent=1 // pred_check_branch
      %65 = sbr.rel (0) target = $region25
    $region24: #{tpu_custom_call.1} parent=1 // pred_region
      %66 = dma.done [#allocation3], 256
    $region25: #{tpu_custom_call.1} parent=1 // pred_fallthru
      _
    // Predicated region
    $region26: #{tpu_custom_call.1} parent=1 // pred_check
      _
    $region27: #{tpu_custom_call.1} parent=1 // pred_check_branch
      %68 = sbr.rel (0) target = $region29
    $region28: #{tpu_custom_call.1} parent=1 // pred_region
      %69 = dma.done [#allocation6], 256
    $region29: #{tpu_custom_call.1} parent=1 // pred_fallthru
      _
    // Predicated region
    $region30: #{tpu_custom_call.1} parent=1 // pred_check
      _
    $region31: #{tpu_custom_call.1} parent=1 // pred_check_branch
      %71 = sbr.rel (0) target = $region33
    $region32: #{tpu_custom_call.1} parent=1 // pred_region
      %72 = dma.done [#allocation6], 512
    $region33: #{tpu_custom_call.1} parent=1 // pred_fallthru
      _
    // Predicated region
    $region34: #{tpu_custom_call.1} parent=1 // pred_check
      _
    $region35: #{tpu_custom_call.1} parent=1 // pred_check_branch
      %74 = sbr.rel (0) target = $region37
    $region36: #{tpu_custom_call.1} parent=1 // pred_region
      %75 = dma.done [#allocation9], 256
    $region37: #{tpu_custom_call.1} parent=1 // pred_fallthru
      _
    %v76 = vld [vmem:[#allocation2] sm:$0xff]
    %v77 = vld [vmem:[#allocation2 + $0x8] sm:$0xff]
    %v78 = vld [vmem:[#allocation7] sm:$0xff]
    %v79 = vld [vmem:[#allocation7 + $0x8] sm:$0xff]
    %v80 = vld [vmem:[#allocation7 + $0x10] sm:$0xff]
    %v81 = vld [vmem:[#allocation7 + $0x18] sm:$0xff]
    %v82 = vld [vmem:[#allocation5] sm:$0xff]
    %v83 = vld [vmem:[#allocation5 + $0x8] sm:$0xff]
    %v84 = vld [vmem:[#allocation8] sm:$0xff]
    %v85 = vld [vmem:[#allocation8 + $0x8] sm:$0xff]
    %vm86 = vcmask 130048
    %v88 = vsel %vm86, %v82, 0
    %v91 = vsel %vm86, %v83, 0
    %93 = vmatprep.subr.mxu0 0.0
    %94 = vmatpush1.msra.mxu0 %v84
    %95 = vmatprep.subr.mxu0 0.0
    %96 = vmatpush1.msra.mxu0 %v85
    %97 = vmatprep.subr.mxu0 0.0
    %98 = vmatpush1.msra.mxu0 0.0
    %99 = vmatprep.subr.mxu0 0.0
    %100 = vmatpush1.msra.mxu0 0.0
    %101 = vmatprep.subr.mxu0 0.0
    %102 = vmatpush1.msra.mxu0 0.0
    %103 = vmatprep.subr.mxu0 0.0
    %104 = vmatpush1.msra.mxu0 0.0
    %105 = vmatprep.subr.mxu0 0.0
    %106 = vmatpush1.msra.mxu0 0.0
    %107 = vmatprep.subr.mxu0 0.0
    %108 = vmatpush1.msra.mxu0 0.0
    %109 = vmatprep.subr.mxu0 0.0
    %110 = vmatpush1.msra.mxu0 0.0
    %111 = vmatprep.subr.mxu0 0.0
    %112 = vmatpush1.msra.mxu0 0.0
    %113 = vmatprep.subr.mxu0 0.0
    %114 = vmatpush1.msra.mxu0 0.0
    %115 = vmatprep.subr.mxu0 0.0
    %116 = vmatpush1.msra.mxu0 0.0
    %117 = vmatprep.subr.mxu0 0.0
    %118 = vmatpush1.msra.mxu0 0.0
    %119 = vmatprep.subr.mxu0 0.0
    %120 = vmatpush1.msra.mxu0 0.0
    %121 = vmatprep.subr.mxu0 0.0
    %122 = vmatpush1.msra.mxu0 0.0
    %123 = vmatprep.subr.mxu0 0.0
    %124 = vmatpush1.msra.mxu0 0.0
    %125 = vmatprep.subr.mxu0 0.0
    %126 = vmatpush1.msra.mxu0 0.0
    %127 = vmatprep.subr.mxu0 0.0
    %128 = vmatpush1.msra.mxu0 0.0
    %129 = vmatprep.subr.mxu0 0.0
    %130 = vmatpush1.msra.mxu0 0.0
    %131 = vmatprep.subr.mxu0 0.0
    %132 = vmatpush1.msra.mxu0 0.0
    %133 = vmatprep.subr.mxu0 0.0
    %134 = vmatpush1.msra.mxu0 0.0
    %135 = vmatprep.subr.mxu0 0.0
    %136 = vmatpush1.msra.mxu0 0.0
    %137 = vmatprep.subr.mxu0 0.0
    %138 = vmatpush1.msra.mxu0 0.0
    %139 = vmatprep.subr.mxu0 0.0
    %140 = vmatpush1.msra.mxu0 0.0
    %141 = vmatprep.subr.mxu0 0.0
    %142 = vmatpush1.msra.mxu0 0.0
    %143 = vmatprep.subr.mxu0 0.0
    %144 = vmatpush1.msra.mxu0 0.0
    %145 = vmatprep.subr.mxu0 0.0
    %146 = vmatpush1.msra.mxu0 0.0
    %147 = vmatprep.subr.mxu0 0.0
    %148 = vmatpush1.msra.mxu0 0.0
    %149 = vmatprep.subr.mxu0 0.0
    %150 = vmatpush1.msra.mxu0 0.0
    %151 = vmatprep.subr.mxu0 0.0
    %152 = vmatpush1.msra.mxu0 0.0
    %153 = vmatprep.subr.mxu0 0.0
    %154 = vmatpush1.msra.mxu0 0.0
    %155 = vmatprep.subr.mxu0 0.0
    %156 = vmatpush1.msra.mxu0 0.0
    %157 = vmatprep.mubr.f32.mxu0 0.0
    %158 = vmatmul.mubr.f32.gmra.mrb[0].mxu0 %v88
    %v159 = vpop.f32.mrb[0].mxu0
    %v160 = vadd.f32 0.0, %v159
    %v161 = vpop.f32.mrb[0].mxu0
    %162 = vmatprep.mubr.f32.mxu0 0.0
    %163 = vmatmul.mubr.f32.gmra.mrb[0].mxu0 %v91
    %v164 = vpop.f32.mrb[0].mxu0
    %v165 = vadd.f32 0.0, %v164
    %v166 = vpop.f32.mrb[0].mxu0
    %167 = vdwg.mxu0
    %vm168 = vcmask 261120
    %v170 = vsel %vm168, %v76, 0
    %v173 = vsel %vm168, %v77, 0
    %175 = vmatprep.subr.mxu0 0.0
    %176 = vmatpush1.msra.mxu0 %v78
    %177 = vmatprep.subr.mxu0 0.0
    %178 = vmatpush1.msra.mxu0 %v79
    %179 = vmatprep.subr.mxu0 0.0
    %180 = vmatpush1.msra.mxu0 %v80
    %181 = vmatprep.subr.mxu0 0.0
    %182 = vmatpush1.msra.mxu0 %v81
    %183 = vmatprep.subr.mxu0 0.0
    %184 = vmatpush1.msra.mxu0 0.0
    %185 = vmatprep.subr.mxu0 0.0
    %186 = vmatpush1.msra.mxu0 0.0
    %187 = vmatprep.subr.mxu0 0.0
    %188 = vmatpush1.msra.mxu0 0.0
    %189 = vmatprep.subr.mxu0 0.0
    %190 = vmatpush1.msra.mxu0 0.0
    %191 = vmatprep.subr.mxu0 0.0
    %192 = vmatpush1.msra.mxu0 0.0
    %193 = vmatprep.subr.mxu0 0.0
    %194 = vmatpush1.msra.mxu0 0.0
    %195 = vmatprep.subr.mxu0 0.0
    %196 = vmatpush1.msra.mxu0 0.0
    %197 = vmatprep.subr.mxu0 0.0
    %198 = vmatpush1.msra.mxu0 0.0
    %199 = vmatprep.subr.mxu0 0.0
    %200 = vmatpush1.msra.mxu0 0.0
    %201 = vmatprep.subr.mxu0 0.0
    %202 = vmatpush1.msra.mxu0 0.0
    %203 = vmatprep.subr.mxu0 0.0
    %204 = vmatpush1.msra.mxu0 0.0
    %205 = vmatprep.subr.mxu0 0.0
    %206 = vmatpush1.msra.mxu0 0.0
    %207 = vmatprep.subr.mxu0 0.0
    %208 = vmatpush1.msra.mxu0 0.0
    %209 = vmatprep.subr.mxu0 0.0
    %210 = vmatpush1.msra.mxu0 0.0
    %211 = vmatprep.subr.mxu0 0.0
    %212 = vmatpush1.msra.mxu0 0.0
    %213 = vmatprep.subr.mxu0 0.0
    %214 = vmatpush1.msra.mxu0 0.0
    %215 = vmatprep.subr.mxu0 0.0
    %216 = vmatpush1.msra.mxu0 0.0
    %217 = vmatprep.subr.mxu0 0.0
    %218 = vmatpush1.msra.mxu0 0.0
    %219 = vmatprep.subr.mxu0 0.0
    %220 = vmatpush1.msra.mxu0 0.0
    %221 = vmatprep.subr.mxu0 0.0
    %222 = vmatpush1.msra.mxu0 0.0
    %223 = vmatprep.subr.mxu0 0.0
    %224 = vmatpush1.msra.mxu0 0.0
    %225 = vmatprep.subr.mxu0 0.0
    %226 = vmatpush1.msra.mxu0 0.0
    %227 = vmatprep.subr.mxu0 0.0
    %228 = vmatpush1.msra.mxu0 0.0
    %229 = vmatprep.subr.mxu0 0.0
    %230 = vmatpush1.msra.mxu0 0.0
    %231 = vmatprep.subr.mxu0 0.0
    %232 = vmatpush1.msra.mxu0 0.0
    %233 = vmatprep.subr.mxu0 0.0
    %234 = vmatpush1.msra.mxu0 0.0
    %235 = vmatprep.subr.mxu0 0.0
    %236 = vmatpush1.msra.mxu0 0.0
    %237 = vmatprep.subr.mxu0 0.0
    %238 = vmatpush1.msra.mxu0 0.0
    %239 = vmatprep.mubr.f32.mxu0 0.0
    %240 = vmatmul.mubr.f32.gmra.mrb[0].mxu0 %v170
    %v241 = vpop.f32.mrb[0].mxu0
    %v242 = vadd.f32 %v160, %v241
    %v243 = vpop.f32.mrb[0].mxu0
    %244 = vmatprep.mubr.f32.mxu0 0.0
    %245 = vmatmul.mubr.f32.gmra.mrb[0].mxu0 %v173
    %v246 = vpop.f32.mrb[0].mxu0
    %v247 = vadd.f32 %v165, %v246
    %v248 = vpop.f32.mrb[0].mxu0
    %249 = vdwg.mxu0
    %v250 = vld [vmem:[%s4] sm:$0x1]
    %v252 = vlaneseq
    %v253 = vshrl.u32 %v252, 7
    %v254 = vsub.s32 0, %v253
    %v255 = vrot.slane %v250, %v254
    %v257 = vadd.f32 %v242, %v255
    %v258 = vadd.f32 %v247, %v255
    %v259 = vmul.f32 %v257, 0.01
    %v260 = vmul.f32 %v258, 0.01
    %v261 = vmax.f32 %v257, %v259
    %v262 = vmax.f32 %v258, %v260
    %263 = vst [vmem:[#allocation10] sm:$0xff] %v261
    %264 = vst [vmem:[#allocation10 + $0x8] sm:$0xff] %v262
    // Predicated region
    $region38: #{tpu_custom_call.1} parent=1 // pred_check
      _
    $region39: #{tpu_custom_call.1} parent=1 // pred_check_branch
      %266 = sbr.rel (0) target = $region41
    $region40: #{tpu_custom_call.1} parent=1 // pred_region
      %s268 = ssub.s32 256, 256
      %269 = vsyncadd [#allocation4], %s268
      %s270 = sshll.u32 [#allocation10], 4
      %s271 = int_to_ptr.vmem [resolvable:$true] %s270
      %276 = dma.vmem_to_hbm [thread:$0]  %s271, 256, %s5, [#allocation4], 128, 128, 8
    $region41: #{tpu_custom_call.1} parent=1 // pred_fallthru
      _
    // Predicated region
    $region42: #{tpu_custom_call.1} parent=1 // pred_check
      _
    $region43: #{tpu_custom_call.1} parent=1 // pred_check_branch
      %278 = sbr.rel (0) target = $region45
    $region44: #{tpu_custom_call.1} parent=1 // pred_region
      %279 = dma.done [#allocation4], 256
    $region45: #{tpu_custom_call.1} parent=1 // pred_fallthru
      _
    %280 = vsyncpa [#allocation3], 1
    %281 = vsyncpa [#allocation6], 1
    %282 = vsyncpa [#allocation9], 1
    %283 = vsyncpa [#allocation4], 1

</llo_original>
